<compile_context>
chip_gen: v6e
topology: v6e:2x2x1
jax: 0.10.0
libtpu: 0.0.40
codegen_flags: <defaults>
</compile_context>

<pallas_src>
import jax
import jax.numpy as jnp
from jax import lax
from jax.experimental import pallas as pl
from jax.experimental.pallas import tpu as pltpu


def _round_up(v, m):
    return ((v + m - 1) // m) * m


def _make_critic_kernel(chunk):
    """Kernel factory; `chunk` (lane sub-tile) is a static Python int."""

    def kernel(x_ref, w1_ref, b1_ref, w2_ref, b2_ref, o_ref):
        tile_b = x_ref.shape[1]
        n_chunks = tile_b // chunk

        # Hoist parameter loads out of the chunk loop (VMEM-resident, tiny).
        w1 = w1_ref[...]          # (hidden, in_dim)
        b1 = b1_ref[...]          # (hidden, 1) column -> lane broadcast
        w2 = w2_ref[...]          # (hidden, 1)
        b2 = b2_ref[0, 0]         # scalar in SMEM

        def body(c, carry):
            start = pl.multiple_of(c * chunk, chunk)
            xb = x_ref[:, pl.ds(start, chunk)]                          # (in, chunk)
            # fc1 on the MXU (K=4 -> one vmatmul push per 128 lanes), f32 acc.
            h = jnp.dot(w1, xb, preferred_element_type=jnp.float32)     # (hid, chunk)
            # Bias add + ReLU on the VPU.
            # TODO(synk): optional micro-opt — fold b1 into fc1 by augmenting
            # K to 5 (ones row) if a bundle dump shows VALU saturation.
            h = jnp.maximum(h + b1, 0.0)
            # fc2 (output width 1): VPU multiply + cross-sublane reduce (XLU).
            # Do NOT move this back onto the MXU (1/128-utilized systolic pass).
            out = jnp.sum(h * w2, axis=0, keepdims=True) + b2           # (1, chunk)
            o_ref[:, pl.ds(start, chunk)] = out.astype(o_ref.dtype)
            return carry

        lax.fori_loop(0, n_chunks, body, 0, unroll=min(n_chunks, 8))

    return kernel


def critic_forward_fm(x_fm, w1, b1, w2, b2, *, tile_b=32768):
    """Feature-major entry point (no wrapper transpose).

    x_fm: (4, B) f32; w1: (4, 64); b1: (1, 64) or (64,); w2: (64, 1); b2: (1, 1).
    Returns (1, B) f32 == fc2(relu(fc1(x)))^T.
    """
    in_dim, B = x_fm.shape
    hidden = w1.shape[1]

    # --- Tile selection -----------------------------------------------------
    b_pad128 = _round_up(max(B, 1), 128)
    # Clamp and force the lane tile to a multiple of 128 (hard layout rule).
    tile_b = max(128, min(int(tile_b), b_pad128))
    tile_b = (tile_b // 128) * 128
    num_tiles = -(-b_pad128 // tile_b)
    # Prefer >= 2 grid steps so the "parallel" batch axis can shard across
    # v7x's two TensorCores (harmless on v5e/v6e).
    if num_tiles == 1 and b_pad128 >= 256:
        num_tiles = 2
    # Rebalance the tile so padding beyond b_pad128 stays minimal.
    tile_b = _round_up(-(-b_pad128 // num_tiles), 128)
    b_pad = num_tiles * tile_b
    grid = (num_tiles,)

    # Inner sub-chunk (256-512 lanes) keeps intermediates vreg-resident.
    chunk = next(c for c in (512, 256, 128) if tile_b % c == 0)

    # --- Operand prep -------------------------------------------------------
    x_p = x_fm if b_pad == B else jnp.pad(x_fm, ((0, 0), (0, b_pad - B)))
    w1_t = w1.T                                   # (64, 4)
    b1_c = b1.reshape(hidden, 1)                  # (64, 1) column
    b2_s = b2.reshape(1, 1)                       # scalar in SMEM

    cost = pl.CostEstimate(
        flops=2 * b_pad * hidden * (in_dim + 1) + b_pad * hidden,
        transcendentals=0,
        bytes_accessed=4 * (b_pad * in_dim + b_pad
                            + hidden * in_dim + 2 * hidden + 1),
    )

    out_fm = pl.pallas_call(
        _make_critic_kernel(chunk),
        out_shape=jax.ShapeDtypeStruct((1, b_pad), jnp.float32),
        grid=grid,
        in_specs=[
            # Streamed input: one lane-tile of the batch per grid step.
            pl.BlockSpec((in_dim, tile_b), lambda i: (0, i)),
            # Weights / biases: constant block index -> DMA'd once, VMEM-resident.
            pl.BlockSpec((hidden, in_dim), lambda i: (0, 0)),
            pl.BlockSpec((hidden, 1), lambda i: (0, 0)),
            pl.BlockSpec((hidden, 1), lambda i: (0, 0)),
            # Scalar output bias lives in SMEM.
            pl.BlockSpec(memory_space=pltpu.MemorySpace.SMEM),
        ],
        out_specs=pl.BlockSpec((1, tile_b), lambda i: (0, i)),
        compiler_params=pltpu.CompilerParams(
            dimension_semantics=("parallel",),
            # Explicit scoped-VMEM sizing: actual footprint is ~O(10*tile_b) B
            # thanks to the chunked inner loop, so 32 MiB is ample on every
            # generation (v5e default is only 16 MiB).
            vmem_limit_bytes=32 * 1024 * 1024,
            # Let XLA fuse the producer of x (pad/transpose) into the input DMA.
            allow_input_fusion=[True, False, False, False, False],
        ),
        cost_estimate=cost,
    )(x_p, w1_t, b1_c, w2, b2_s)

    # Padded batch columns hold relu(b1).w2 + b2 garbage; slice them off
    # BEFORE any reuse of the padded region.
    return out_fm[:, :B]


def _critic_ref(x, w1, b1, w2, b2):
    """Pure-JAX reference / small-batch fast path (full f32 precision)."""
    h = jnp.maximum(
        jnp.dot(x, w1, precision=lax.Precision.HIGHEST) + b1.reshape(1, -1), 0.0)
    return jnp.dot(h, w2, precision=lax.Precision.HIGHEST) + b2.reshape(1, 1)


def critic_forward(x, w1, b1, w2, b2, *, tile_b=32768,
                   small_batch_threshold=2048, force_pallas=False):
    """PyTorch-convention entry: x (B, 4) -> (B, 1)."""
    B = x.shape[0]
    # Small-batch fast path: for CartPole-scale B, pad + transpose + launch +
    # slice is pure fixed overhead; a fused XLA MLP is strictly faster.
    if B <= small_batch_threshold and not force_pallas:
        return _critic_ref(x, w1, b1, w2, b2)
    out_fm = critic_forward_fm(x.T, w1, b1, w2, b2, tile_b=tile_b)
    return out_fm.T                                    # (B, 1)


def init_params(key):
    """Deterministic init mirroring nn.Linear shapes (stored as (in, out))."""
    k1, k2, k3, k4 = jax.random.split(key, 4)
    bound1 = 1.0 / jnp.sqrt(4.0)
    bound2 = 1.0 / jnp.sqrt(64.0)
    w1 = jax.random.uniform(k1, (4, 64), jnp.float32, -bound1, bound1)
    b1 = jax.random.uniform(k2, (1, 64), jnp.float32, -bound1, bound1)
    w2 = jax.random.uniform(k3, (64, 1), jnp.float32, -bound2, bound2)
    b2 = jax.random.uniform(k4, (1, 1), jnp.float32, -bound2, bound2)
    return w1, b1, w2, b2


if __name__ == "__main__":
    key = jax.random.PRNGKey(0)
    pkey, xkey1, xkey2 = jax.random.split(key, 3)
    w1, b1, w2, b2 = init_params(pkey)

    # Gym CartPole-like observation batch: 8 states of dim 4.
    x_small = jax.random.normal(xkey1, (8, 4), jnp.float32)

    # Force the Pallas path so the kernel itself is exercised at this size.
    out_small = jax.block_until_ready(
        critic_forward(x_small, w1, b1, w2, b2, force_pallas=True))
    ref_small = _critic_ref(x_small, w1, b1, w2, b2)
    assert out_small.shape == (8, 1)
    assert jnp.allclose(out_small, ref_small, atol=1e-5, rtol=1e-5)

    # Small-batch fast path (no pallas launch) agrees too.
    out_fast = critic_forward(x_small, w1, b1, w2, b2)
    assert jnp.allclose(out_fast, ref_small, atol=1e-5, rtol=1e-5)

    # Moderate batch exercising the multi-tile grid + chunked inner loop.
    x_big = jax.random.normal(xkey2, (4096, 4), jnp.float32)
    out_big = jax.block_until_ready(
        critic_forward(x_big, w1, b1, w2, b2, force_pallas=True))
    ref_big = _critic_ref(x_big, w1, b1, w2, b2)
    assert out_big.shape == (4096, 1)
    assert jnp.allclose(out_big, ref_big, atol=1e-4, rtol=1e-4)

    print("KERNEL_OK")
</pallas_src>

<mosaic_0001>
module attributes {stable_mosaic.version = 11 : i64} {
  func.func @kernel(%arg0: i32, %arg1: memref<4x128xf32, #tpu.memory_space<vmem>>, %arg2: memref<64x4xf32, #tpu.memory_space<vmem>>, %arg3: memref<64x1xf32, #tpu.memory_space<vmem>>, %arg4: memref<64x1xf32, #tpu.memory_space<vmem>>, %arg5: memref<1x1xf32, #tpu.memory_space<smem>>, %arg6: memref<1x128xf32, #tpu.memory_space<vmem>>) attributes {dimension_semantics = [#tpu.dimension_semantics<parallel>], iteration_bounds = array<i64: 1>, scalar_prefetch = 0 : i64, scratch_operands = 0 : i64, tpu.core_type = #tpu.core_type<tc>, window_params = [{transform_indices = @transform_0, window_bounds = array<i64: 4, 128>}, {pipeline_mode = #tpu.pipeline_mode<synchronous>, transform_indices = @transform_1, window_bounds = array<i64: 64, 4>}, {pipeline_mode = #tpu.pipeline_mode<synchronous>, transform_indices = @transform_2, window_bounds = array<i64: 64, 1>}, {pipeline_mode = #tpu.pipeline_mode<synchronous>, transform_indices = @transform_3, window_bounds = array<i64: 64, 1>}, {transform_indices = @transform_4, window_bounds = array<i64: 1, 1>}, {transform_indices = @transform_5, window_bounds = array<i64: 1, 128>}]} {
    %c0 = arith.constant 0 : index
    %c0_0 = arith.constant 0 : index
    %0 = vector.load %arg2[%c0, %c0_0] : memref<64x4xf32, #tpu.memory_space<vmem>>, vector<64x4xf32>
    %c0_1 = arith.constant 0 : index
    %c0_2 = arith.constant 0 : index
    %1 = vector.load %arg3[%c0_1, %c0_2] : memref<64x1xf32, #tpu.memory_space<vmem>>, vector<64x1xf32>
    %c0_3 = arith.constant 0 : index
    %c0_4 = arith.constant 0 : index
    %2 = vector.load %arg4[%c0_3, %c0_4] : memref<64x1xf32, #tpu.memory_space<vmem>>, vector<64x1xf32>
    %c0_5 = arith.constant 0 : index
    %c0_6 = arith.constant 0 : index
    %3 = memref.load %arg5[%c0_5, %c0_6] : memref<1x1xf32, #tpu.memory_space<smem>>
    %c0_i32 = arith.constant 0 : i32
    %c128_i32 = arith.constant 128 : i32
    %4 = arith.muli %c0_i32, %c128_i32 : i32
    %5 = tpu.assume_multiple %4, 128 : i32
    %c0_7 = arith.constant 0 : index
    %6 = arith.index_cast %5 : i32 to index
    %7 = vector.load %arg1[%c0_7, %6] : memref<4x128xf32, #tpu.memory_space<vmem>>, vector<4x128xf32>
    %cst = arith.constant dense<0.000000e+00> : vector<64x128xf32>
    %8 = tpu.matmul %0, %7, %cst {dimension_numbers = #tpu.dot_dimension_numbers<[1], [0], [0], [1], [0, 0, 1, 1], [], []>} : vector<64x4xf32>, vector<4x128xf32>, vector<64x128xf32> -> vector<64x128xf32>
    %9 = vector.broadcast %1 : vector<64x1xf32> to vector<64x128xf32>
    %10 = arith.addf %8, %9 : vector<64x128xf32>
    %cst_8 = arith.constant 0.000000e+00 : f32
    %11 = vector.broadcast %cst_8 : f32 to vector<64x128xf32>
    %12 = arith.maximumf %10, %11 : vector<64x128xf32>
    %13 = vector.broadcast %2 : vector<64x1xf32> to vector<64x128xf32>
    %14 = arith.mulf %12, %13 : vector<64x128xf32>
    %cst_9 = arith.constant dense<0.000000e+00> : vector<128xf32>
    %15 = vector.multi_reduction <add>, %14, %cst_9 [0] : vector<64x128xf32> to vector<128xf32>
    %16 = vector.shape_cast %15 : vector<128xf32> to vector<1x128xf32>
    %17 = vector.broadcast %3 : f32 to vector<1x128xf32>
    %18 = arith.addf %16, %17 : vector<1x128xf32>
    %c0_10 = arith.constant 0 : index
    %19 = arith.index_cast %5 : i32 to index
    %20 = vector.load %arg6[%c0_10, %19] : memref<1x128xf32, #tpu.memory_space<vmem>>, vector<1x128xf32>
    tpu.vector_store %arg6[%c0_10, %19], %18 {strides = array<i32>} : memref<1x128xf32, #tpu.memory_space<vmem>>, vector<1x128xf32>,
    %c1_i32 = arith.constant 1 : i32
    return
  }
  func.func @transform_0(%arg0: i32) -> (i32, i32) {
    %c0_i32 = arith.constant 0 : i32
    %c0_i32_0 = arith.constant 0 : i32
    return %c0_i32, %arg0 : i32, i32
  }
  func.func @transform_1(%arg0: i32) -> (i32, i32) {
    %c0_i32 = arith.constant 0 : i32
    %c0_i32_0 = arith.constant 0 : i32
    %c0_i32_1 = arith.constant 0 : i32
    return %c0_i32, %c0_i32_0 : i32, i32
  }
  func.func @transform_2(%arg0: i32) -> (i32, i32) {
    %c0_i32 = arith.constant 0 : i32
    %c0_i32_0 = arith.constant 0 : i32
    %c0_i32_1 = arith.constant 0 : i32
    return %c0_i32, %c0_i32_0 : i32, i32
  }
  func.func @transform_3(%arg0: i32) -> (i32, i32) {
    %c0_i32 = arith.constant 0 : i32
    %c0_i32_0 = arith.constant 0 : i32
    %c0_i32_1 = arith.constant 0 : i32
    return %c0_i32, %c0_i32_0 : i32, i32
  }
  func.func @transform_4(%arg0: i32) -> (i32, i32) {
    %c0_i32 = arith.constant 0 : i32
    %c0_i32_0 = arith.constant 0 : i32
    %c0_i32_1 = arith.constant 0 : i32
    return %c0_i32, %c0_i32_0 : i32, i32
  }
  func.func @transform_5(%arg0: i32) -> (i32, i32) {
    %c0_i32 = arith.constant 0 : i32
    %c0_i32_0 = arith.constant 0 : i32
    return %c0_i32, %arg0 : i32, i32
  }
}

</mosaic_0001>

<llo_original>
// kernel: tpu_custom_call.1
$region0: #{tpu_custom_call.1}
  #allocation0 [shape = 'u32[]', space=smem, size = 0x4, offset = 0x4, fixed_abs, tag = 'smem constant byte address 0x4 - core index']
  #allocation1 [shape = 'u32[144,128]{1,0:T(1,128)}', space=vmem, size = 0x12000, scoped, tag = 'internal scratch']
  #allocation2 [shape = 'f32[1,1]{1,0:T(1,128)S(6)}', space=smem, size = 0x200, scoped, tag = 'scoped memory for tpu_custom_call.1']
  %s0 = inlined_call_operand.vmem [shape: f32[4,128], index: 0, kind: input, shape index: {}]
  %s1 = inlined_call_operand.vmem [shape: f32[64,4], index: 1, kind: input, shape index: {}]
  %s2 = inlined_call_operand.vmem [shape: f32[64,1], index: 2, kind: input, shape index: {}]
  %s3 = inlined_call_operand.vmem [shape: f32[64,1], index: 3, kind: input, shape index: {}]
  %s4 = inlined_call_operand.<no memory space> [shape: f32[1,1], index: 4, kind: input, shape index: {}]
  %s5 = inlined_call_operand.hbm [shape: f32[1,128], index: 5, kind: output, shape index: {}]
  %s6 = sld [smem:[#allocation0]]
  $region30: #{tpu_custom_call.1} parent=0
    _
  %s8 = ssub.s32 1, %s6
  %s9 = scalar_select 0, %s8, %s6
  %10 = sst [smem:[#allocation2]] %s4
  $region1: #{tpu_custom_call.1} parent=0
    #allocation3 [shape = 'u8[512]{0}', space=vmem, size = 0x400, scoped, tag = 'output window, operand 0, single buffered']
    #allocation4 [shape = 's32[1]{0}', space=sflag, size = 0x4, scoped, tag = 'scoped memory for tpu_custom_call.1']
    %11 = vsyncpa [#allocation4], 0
    // Predicated region
    $region2: #{tpu_custom_call.1} parent=1 // pred_check
      _
    $region3: #{tpu_custom_call.1} parent=1 // pred_check_branch
      %13 = sbr.rel (0) target = $region5
    $region4: #{tpu_custom_call.1} parent=1 // pred_region
      _
    $region5: #{tpu_custom_call.1} parent=1 // pred_fallthru
      _
    // Predicated region
    $region6: #{tpu_custom_call.1} parent=1 // pred_check
      _
    $region7: #{tpu_custom_call.1} parent=1 // pred_check_branch
      %15 = sbr.rel (0) target = $region9
    $region8: #{tpu_custom_call.1} parent=1 // pred_region
      _
    $region9: #{tpu_custom_call.1} parent=1 // pred_fallthru
      _
    // Predicated region
    $region10: #{tpu_custom_call.1} parent=1 // pred_check
      _
    $region11: #{tpu_custom_call.1} parent=1 // pred_check_branch
      %17 = sbr.rel (0) target = $region13
    $region12: #{tpu_custom_call.1} parent=1 // pred_region
      _
    $region13: #{tpu_custom_call.1} parent=1 // pred_fallthru
      _
    // Predicated region
    $region14: #{tpu_custom_call.1} parent=1 // pred_check
      _
    $region15: #{tpu_custom_call.1} parent=1 // pred_check_branch
      %19 = sbr.rel (0) target = $region17
    $region16: #{tpu_custom_call.1} parent=1 // pred_region
      _
    $region17: #{tpu_custom_call.1} parent=1 // pred_fallthru
      _
    // Predicated region
    $region18: #{tpu_custom_call.1} parent=1 // pred_check
      _
    $region19: #{tpu_custom_call.1} parent=1 // pred_check_branch
      %21 = sbr.rel (0) target = $region21
    $region20: #{tpu_custom_call.1} parent=1 // pred_region
      _
    $region21: #{tpu_custom_call.1} parent=1 // pred_fallthru
      _
    %v22 = vld [vmem:[%s1] sm:$0xff]
    %v23 = vld [vmem:[%s1 + $0x8] sm:$0xff]
    %v24 = vld [vmem:[%s1 + $0x10] sm:$0xff]
    %v25 = vld [vmem:[%s1 + $0x18] sm:$0xff]
    %v26 = vld [vmem:[%s1 + $0x20] sm:$0xff]
    %v27 = vld [vmem:[%s1 + $0x28] sm:$0xff]
    %v28 = vld [vmem:[%s1 + $0x30] sm:$0xff]
    %v29 = vld [vmem:[%s1 + $0x38] sm:$0xff]
    %v30 = vld [vmem:[%s2] sm:$0xff]
    %v31 = vld [vmem:[%s2 + $0x8] sm:$0xff]
    %v32 = vld [vmem:[%s2 + $0x10] sm:$0xff]
    %v33 = vld [vmem:[%s2 + $0x18] sm:$0xff]
    %v34 = vld [vmem:[%s2 + $0x20] sm:$0xff]
    %v35 = vld [vmem:[%s2 + $0x28] sm:$0xff]
    %v36 = vld [vmem:[%s2 + $0x30] sm:$0xff]
    %v37 = vld [vmem:[%s2 + $0x38] sm:$0xff]
    %v38 = vld [vmem:[%s3] sm:$0xff]
    %v39 = vld [vmem:[%s3 + $0x8] sm:$0xff]
    %v40 = vld [vmem:[%s3 + $0x10] sm:$0xff]
    %v41 = vld [vmem:[%s3 + $0x18] sm:$0xff]
    %v42 = vld [vmem:[%s3 + $0x20] sm:$0xff]
    %v43 = vld [vmem:[%s3 + $0x28] sm:$0xff]
    %v44 = vld [vmem:[%s3 + $0x30] sm:$0xff]
    %v45 = vld [vmem:[%s3 + $0x38] sm:$0xff]
    %s46 = sld [smem:[#allocation2]]
    %v47 = vld [vmem:[%s0] sm:$0xf]
    %49 = vset.pattern.permute.xlu0 0
    %50 = vperm.xlu0 %49, %v30
    %v51 = vpop.permute.xlu0 %50
    %54 = vset.pattern.permute.xlu0 0
    %55 = vperm.xlu0 %54, %v31
    %v56 = vpop.permute.xlu0 %55
    %59 = vset.pattern.permute.xlu0 0
    %60 = vperm.xlu0 %59, %v32
    %v61 = vpop.permute.xlu0 %60
    %64 = vset.pattern.permute.xlu0 0
    %65 = vperm.xlu0 %64, %v33
    %v66 = vpop.permute.xlu0 %65
    %69 = vset.pattern.permute.xlu0 0
    %70 = vperm.xlu0 %69, %v34
    %v71 = vpop.permute.xlu0 %70
    %74 = vset.pattern.permute.xlu0 0
    %75 = vperm.xlu0 %74, %v35
    %v76 = vpop.permute.xlu0 %75
    %79 = vset.pattern.permute.xlu0 0
    %80 = vperm.xlu0 %79, %v36
    %v81 = vpop.permute.xlu0 %80
    %84 = vset.pattern.permute.xlu0 0
    %85 = vperm.xlu0 %84, %v37
    %v86 = vpop.permute.xlu0 %85
    %vm88 = vcmask 31744
    %v90 = vsel %vm88, %v22, 0
    %v93 = vsel %vm88, %v23, 0
    %v96 = vsel %vm88, %v24, 0
    %v99 = vsel %vm88, %v25, 0
    %v102 = vsel %vm88, %v26, 0
    %v105 = vsel %vm88, %v27, 0
    %v108 = vsel %vm88, %v28, 0
    %v111 = vsel %vm88, %v29, 0
    %vm113 = vcmask 1043456
    %v115 = vsel %vm113, %v47, 0
    %117 = vmatprep.subr.mxu0 0.0
    %118 = vmatpush1.msra.mxu0 0.0
    %119 = vmatprep.subr.mxu0 0.0
    %120 = vmatpush1.msra.mxu0 0.0
    %121 = vmatprep.subr.mxu0 0.0
    %122 = vmatpush1.msra.mxu0 0.0
    %123 = vmatprep.subr.mxu0 0.0
    %124 = vmatpush1.msra.mxu0 0.0
    %125 = vmatprep.subr.mxu0 0.0
    %126 = vmatpush1.msra.mxu0 0.0
    %127 = vmatprep.subr.mxu0 0.0
    %128 = vmatpush1.msra.mxu0 0.0
    %129 = vmatprep.subr.mxu0 0.0
    %130 = vmatpush1.msra.mxu0 0.0
    %131 = vmatprep.subr.mxu0 0.0
    %132 = vmatpush1.msra.mxu0 0.0
    %133 = vmatprep.subr.mxu0 0.0
    %134 = vmatpush1.msra.mxu0 0.0
    %135 = vmatprep.subr.mxu0 0.0
    %136 = vmatpush1.msra.mxu0 0.0
    %137 = vmatprep.subr.mxu0 0.0
    %138 = vmatpush1.msra.mxu0 0.0
    %139 = vmatprep.subr.mxu0 0.0
    %140 = vmatpush1.msra.mxu0 0.0
    %141 = vmatprep.subr.mxu0 0.0
    %142 = vmatpush1.msra.mxu0 0.0
    %143 = vmatprep.subr.mxu0 0.0
    %144 = vmatpush1.msra.mxu0 0.0
    %145 = vmatprep.subr.mxu0 0.0
    %146 = vmatpush1.msra.mxu0 0.0
    %147 = vmatprep.subr.mxu0 0.0
    %148 = vmatpush1.msra.mxu0 %v115
    %149 = vmatprep.subr.mxu0 0.0
    %150 = vmatpush2.msra.mxu0 0.0
    %151 = vmatprep.subr.mxu0 0.0
    %152 = vmatpush2.msra.mxu0 0.0
    %153 = vmatprep.subr.mxu0 0.0
    %154 = vmatpush2.msra.mxu0 0.0
    %155 = vmatprep.subr.mxu0 0.0
    %156 = vmatpush2.msra.mxu0 0.0
    %157 = vmatprep.subr.mxu0 0.0
    %158 = vmatpush2.msra.mxu0 0.0
    %159 = vmatprep.subr.mxu0 0.0
    %160 = vmatpush2.msra.mxu0 0.0
    %161 = vmatprep.subr.mxu0 0.0
    %162 = vmatpush2.msra.mxu0 0.0
    %163 = vmatprep.subr.mxu0 0.0
    %164 = vmatpush2.msra.mxu0 0.0
    %165 = vmatprep.subr.mxu0 0.0
    %166 = vmatpush2.msra.mxu0 0.0
    %167 = vmatprep.subr.mxu0 0.0
    %168 = vmatpush2.msra.mxu0 0.0
    %169 = vmatprep.subr.mxu0 0.0
    %170 = vmatpush2.msra.mxu0 0.0
    %171 = vmatprep.subr.mxu0 0.0
    %172 = vmatpush2.msra.mxu0 0.0
    %173 = vmatprep.subr.mxu0 0.0
    %174 = vmatpush2.msra.mxu0 0.0
    %175 = vmatprep.subr.mxu0 0.0
    %176 = vmatpush2.msra.mxu0 0.0
    %177 = vmatprep.subr.mxu0 0.0
    %178 = vmatpush2.msra.mxu0 0.0
    %179 = vmatprep.subr.mxu0 0.0
    %180 = vmatpush2.msra.mxu0 0.0
    %181 = vmatprep.mubr.f32.mxu0 0.0
    %182 = vmatmul.mubr.f32.gmra.mxu0 %v90
    %v183 = vpop.f32.mrf.mxu0
    %v184 = vadd.f32 %v51, %v183
    %v185 = vpop.f32.mrf.mxu0
    %186 = vmatprep.mubr.f32.mxu0 0.0
    %187 = vmatmul.mubr.f32.gmra.mxu0 %v93
    %v188 = vpop.f32.mrf.mxu0
    %v189 = vadd.f32 %v56, %v188
    %v190 = vpop.f32.mrf.mxu0
    %191 = vmatprep.mubr.f32.mxu0 0.0
    %192 = vmatmul.mubr.f32.gmra.mxu0 %v96
    %v193 = vpop.f32.mrf.mxu0
    %v194 = vadd.f32 %v61, %v193
    %v195 = vpop.f32.mrf.mxu0
    %196 = vmatprep.mubr.f32.mxu0 0.0
    %197 = vmatmul.mubr.f32.gmra.mxu0 %v99
    %v198 = vpop.f32.mrf.mxu0
    %v199 = vadd.f32 %v66, %v198
    %v200 = vpop.f32.mrf.mxu0
    %201 = vmatprep.mubr.f32.mxu0 0.0
    %202 = vmatmul.mubr.f32.gmra.mxu0 %v102
    %v203 = vpop.f32.mrf.mxu0
    %v204 = vadd.f32 %v71, %v203
    %v205 = vpop.f32.mrf.mxu0
    %206 = vmatprep.mubr.f32.mxu0 0.0
    %207 = vmatmul.mubr.f32.gmra.mxu0 %v105
    %v208 = vpop.f32.mrf.mxu0
    %v209 = vadd.f32 %v76, %v208
    %v210 = vpop.f32.mrf.mxu0
    %211 = vmatprep.mubr.f32.mxu0 0.0
    %212 = vmatmul.mubr.f32.gmra.mxu0 %v108
    %v213 = vpop.f32.mrf.mxu0
    %v214 = vadd.f32 %v81, %v213
    %v215 = vpop.f32.mrf.mxu0
    %216 = vmatprep.mubr.f32.mxu0 0.0
    %217 = vmatmul.mubr.f32.gmra.mxu0 %v111
    %v218 = vpop.f32.mrf.mxu0
    %v219 = vadd.f32 %v86, %v218
    %v220 = vpop.f32.mrf.mxu0
    %221 = vdwg.mxu0
    %v222 = vmax.f32 %v184, 0.0
    %v223 = vmax.f32 %v189, 0.0
    %v224 = vmax.f32 %v194, 0.0
    %v225 = vmax.f32 %v199, 0.0
    %v226 = vmax.f32 %v204, 0.0
    %v227 = vmax.f32 %v209, 0.0
    %v228 = vmax.f32 %v214, 0.0
    %v229 = vmax.f32 %v219, 0.0
    %231 = vset.pattern.permute.xlu0 0
    %232 = vperm.xlu0 %231, %v38
    %v233 = vpop.permute.xlu0 %232
    %236 = vset.pattern.permute.xlu0 0
    %237 = vperm.xlu0 %236, %v39
    %v238 = vpop.permute.xlu0 %237
    %241 = vset.pattern.permute.xlu0 0
    %242 = vperm.xlu0 %241, %v40
    %v243 = vpop.permute.xlu0 %242
    %246 = vset.pattern.permute.xlu0 0
    %247 = vperm.xlu0 %246, %v41
    %v248 = vpop.permute.xlu0 %247
    %251 = vset.pattern.permute.xlu0 0
    %252 = vperm.xlu0 %251, %v42
    %v253 = vpop.permute.xlu0 %252
    %256 = vset.pattern.permute.xlu0 0
    %257 = vperm.xlu0 %256, %v43
    %v258 = vpop.permute.xlu0 %257
    %261 = vset.pattern.permute.xlu0 0
    %262 = vperm.xlu0 %261, %v44
    %v263 = vpop.permute.xlu0 %262
    %266 = vset.pattern.permute.xlu0 0
    %267 = vperm.xlu0 %266, %v45
    %v268 = vpop.permute.xlu0 %267
    %v270 = vmul.f32 %v222, %v233
    %v271 = vmul.f32 %v223, %v238
    %v272 = vmul.f32 %v224, %v243
    %v273 = vmul.f32 %v225, %v248
    %v274 = vmul.f32 %v226, %v253
    %v275 = vmul.f32 %v227, %v258
    %v276 = vmul.f32 %v228, %v263
    %v277 = vmul.f32 %v229, %v268
    %v278 = vadd.f32 %v270, %v271
    %v279 = vadd.f32 %v278, %v272
    %v280 = vadd.f32 %v279, %v273
    %v281 = vadd.f32 %v280, %v274
    %v282 = vadd.f32 %v281, %v275
    %v283 = vadd.f32 %v282, %v276
    %v284 = vadd.f32 %v283, %v277
    %v285 = vrot.slane %v284, 4
    %v286 = vadd.f32 %v284, %v285
    %v287 = vrot.slane %v286, 2
    %v288 = vadd.f32 %v286, %v287
    %v289 = vrot.slane %v288, 1
    %v290 = vadd.f32 %v288, %v289
    %v291 = vstv %s46
    %v292 = vadd.f32 %v290, %v291
    %293 = vst [vmem:[#allocation3] sm:$0x1] %v292
    // Predicated region
    $region22: #{tpu_custom_call.1} parent=1 // pred_check
      _
    $region23: #{tpu_custom_call.1} parent=1 // pred_check_branch
      %295 = sbr.rel (0) target = $region25
    $region24: #{tpu_custom_call.1} parent=1 // pred_region
      %s297 = ssub.s32 16, 16
      %298 = vsyncadd [#allocation4], %s297
      %s300 = sshll.u32 [#allocation3], 4
      %s301 = int_to_ptr.vmem [resolvable:$true] %s300
      %303 = dma.vmem_to_hbm [thread:$0]  %s301, 16, %s5, [#allocation4]
    $region25: #{tpu_custom_call.1} parent=1 // pred_fallthru
      _
    // Predicated region
    $region26: #{tpu_custom_call.1} parent=1 // pred_check
      _
    $region27: #{tpu_custom_call.1} parent=1 // pred_check_branch
      %305 = sbr.rel (0) target = $region29
    $region28: #{tpu_custom_call.1} parent=1 // pred_region
      %306 = dma.done [#allocation4], 16
    $region29: #{tpu_custom_call.1} parent=1 // pred_fallthru
      _
    %307 = vsyncpa [#allocation4], 1

</llo_original>
